<compile_context>
chip_gen: v6e
topology: v6e:2x2x1
jax: 0.10.0
libtpu: 0.0.40
codegen_flags: <defaults>
</compile_context>

<pallas_src>
import jax
import jax.numpy as jnp
from jax.experimental import pallas as pl
from jax.experimental.pallas import tpu as pltpu
import numpy as np


def decoder_kernel(x_ref, h0_ref, wi_ref, wh_ref, bias_ref, wout_ref,
                   logp_ref, hout_ref):
    S, I = x_ref.shape
    H = h0_ref.shape[1]

    x = x_ref[...]                              # (S, I)
    wh = wh_ref[...]                            # (H, 3H)  columns = [r | z | n]
    b_rzn = bias_ref[:, :3 * H]                 # (1, 3H)  [b_ir+b_hr | b_iz+b_hz | b_in]
    bhn = bias_ref[:, 3 * H:4 * H]              # (1, H)   b_hn (stays inside r*(.))

    # --- Hoisted input projection: single matmul for all three gates, whole sequence.
    gx = jnp.dot(x, wi_ref[...], preferred_element_type=jnp.float32) + b_rzn   # (S, 3H)
    gx_rz = gx[:, :2 * H]                       # (S, 2H)  lane slices hoisted out of loop
    gx_n = gx[:, 2 * H:3 * H]                   # (S, H)

    h = h0_ref[...]                             # (1, H)
    h_first = h

    # --- Fully unrolled recurrence (S static & tiny). One MXU push per step.
    for t in range(S):
        gh = jnp.dot(h, wh, preferred_element_type=jnp.float32)        # (1, 3H)
        rz = jax.nn.sigmoid(gx_rz[t:t + 1, :] + gh[:, :2 * H])          # one EUP sigmoid
        r = rz[:, :H]
        z = rz[:, H:2 * H]
        n = jnp.tanh(gx_n[t:t + 1, :] + r * (gh[:, 2 * H:3 * H] + bhn))
        h = n + z * (h - n)                     # == (1 - z) * n + z * h
        if t == 0:
            h_first = h                         # GRU output at timestep 0

    hout_ref[...] = h                           # final hidden state

    # --- Output head on output[0] + fused log-softmax. W_out and b_out are packed
    #     as rows [0:H] and [H] of wout_ref.
    logits = (jnp.dot(h_first, wout_ref[:H, :], preferred_element_type=jnp.float32)
              + wout_ref[H:H + 1, :])
    m = jnp.max(logits, axis=-1, keepdims=True)
    ex = jnp.exp(logits - m)
    lse = jnp.log(jnp.sum(ex, axis=-1, keepdims=True))
    logp_ref[...] = logits - m - lse


def pack_decoder_params(params):
    """One-time host-side packing of PyTorch-layout GRU/Linear weights.

    Call this ONCE and reuse the result for every decoder_forward call.
    """
    w_ih = jnp.asarray(params["w_ih"], jnp.float32)   # (3H, I), gate order r|z|n
    w_hh = jnp.asarray(params["w_hh"], jnp.float32)   # (3H, H)
    b_ih = jnp.asarray(params["b_ih"], jnp.float32)   # (3H,)
    b_hh = jnp.asarray(params["b_hh"], jnp.float32)   # (3H,)
    H = w_hh.shape[1]

    wi_packed = w_ih.T                                # (I, 3H)
    wh_packed = w_hh.T                                # (H, 3H)

    # r/z biases fold (input+hidden); n keeps b_in with the input projection and
    # b_hn separate (it sits inside r*(.)). All packed lane-dense into (1, 4H).
    bias_packed = jnp.concatenate(
        [b_ih[:H] + b_hh[:H],
         b_ih[H:2 * H] + b_hh[H:2 * H],
         b_ih[2 * H:3 * H],
         b_hh[2 * H:3 * H]])[None, :]                 # (1, 4H)

    wout_packed = jnp.concatenate(
        [jnp.asarray(params["w_out"], jnp.float32).T,           # (H, O)
         jnp.asarray(params["b_out"], jnp.float32)[None, :]],   # (1, O)
        axis=0)                                                 # (H+1, O)

    return {"wi": wi_packed, "wh": wh_packed,
            "bias": bias_packed, "wout": wout_packed}


@jax.jit
def decoder_forward(x, hidden0, packed):
    """x: (S, 1, I) f32, hidden0: (1, 1, H) f32, packed: pack_decoder_params(...).

    Returns (log_probs (1, O), hidden (1, 1, H))."""
    S, B, I = x.shape
    assert B == 1, "Decoder is batch=1 (matches initHidden)."
    H = packed["wh"].shape[0]
    O = packed["wout"].shape[1]

    x2 = x.reshape(S, I)
    h0 = hidden0.reshape(1, H)

    vmem = pl.BlockSpec(memory_space=pltpu.MemorySpace.VMEM)
    logp, h_n = pl.pallas_call(
        decoder_kernel,
        out_shape=(jax.ShapeDtypeStruct((1, O), jnp.float32),
                   jax.ShapeDtypeStruct((1, H), jnp.float32)),
        in_specs=[vmem] * 6,
        out_specs=(vmem, vmem),
    )(x2, h0, packed["wi"], packed["wh"], packed["bias"], packed["wout"])

    return logp, h_n.reshape(1, 1, H)


def decoder_reference(x, hidden0, params):
    """Pure-JAX reference mirroring PyTorch nn.GRU / nn.Linear / LogSoftmax."""
    S, B, I = x.shape
    H = params["w_hh"].shape[1]
    h = hidden0.reshape(1, H)
    out_first = None
    for t in range(S):
        xt = x[t].reshape(1, I)
        gx = xt @ params["w_ih"].T + params["b_ih"]
        gh = h @ params["w_hh"].T + params["b_hh"]
        r = jax.nn.sigmoid(gx[:, :H] + gh[:, :H])
        z = jax.nn.sigmoid(gx[:, H:2 * H] + gh[:, H:2 * H])
        n = jnp.tanh(gx[:, 2 * H:] + r * gh[:, 2 * H:])
        h = (1.0 - z) * n + z * h
        if t == 0:
            out_first = h
    logits = out_first @ params["w_out"].T + params["b_out"]
    logp = jax.nn.log_softmax(logits, axis=1)
    return logp, h.reshape(1, 1, H)


def init_params(key, input_size, hidden_size, output_size):
    ks = jax.random.split(key, 6)
    s = 0.1
    return {
        "w_ih": jax.random.normal(ks[0], (3 * hidden_size, input_size), jnp.float32) * s,
        "w_hh": jax.random.normal(ks[1], (3 * hidden_size, hidden_size), jnp.float32) * s,
        "b_ih": jax.random.normal(ks[2], (3 * hidden_size,), jnp.float32) * s,
        "b_hh": jax.random.normal(ks[3], (3 * hidden_size,), jnp.float32) * s,
        "w_out": jax.random.normal(ks[4], (output_size, hidden_size), jnp.float32) * s,
        "b_out": jax.random.normal(ks[5], (output_size,), jnp.float32) * s,
    }


if __name__ == "__main__":
    INPUT_SIZE = 16
    HIDDEN_SIZE = 32
    OUTPUT_SIZE = 16
    SEQ_LEN = 8

    root = jax.random.PRNGKey(0)
    k_param, k_x = jax.random.split(root)

    params = init_params(k_param, INPUT_SIZE, HIDDEN_SIZE, OUTPUT_SIZE)
    x = jax.random.normal(k_x, (SEQ_LEN, 1, INPUT_SIZE), jnp.float32)
    hidden0 = jnp.zeros((1, 1, HIDDEN_SIZE), jnp.float32)   # Decoder.initHidden()

    # One-time packing (cache this across decode steps in a real loop).
    packed = pack_decoder_params(params)
    packed = jax.tree_util.tree_map(jax.block_until_ready, packed)

    logp_out, hidden_out = decoder_forward(x, hidden0, packed)
    logp_out = jax.block_until_ready(logp_out)
    hidden_out = jax.block_until_ready(hidden_out)

    logp_ref, hidden_ref = decoder_reference(x, hidden0, params)
    np.testing.assert_allclose(np.asarray(logp_out), np.asarray(logp_ref),
                               rtol=1e-5, atol=1e-5)
    np.testing.assert_allclose(np.asarray(hidden_out), np.asarray(hidden_ref),
                               rtol=1e-5, atol=1e-5)

    print("KERNEL_OK")
</pallas_src>

<mosaic_0001>
module attributes {stable_mosaic.version = 11 : i64} {
  func.func @decoder_kernel(%arg0: memref<8x16xf32, #tpu.memory_space<vmem>>, %arg1: memref<1x32xf32, #tpu.memory_space<vmem>>, %arg2: memref<16x96xf32, #tpu.memory_space<vmem>>, %arg3: memref<32x96xf32, #tpu.memory_space<vmem>>, %arg4: memref<1x128xf32, #tpu.memory_space<vmem>>, %arg5: memref<33x16xf32, #tpu.memory_space<vmem>>, %arg6: memref<1x16xf32, #tpu.memory_space<vmem>>, %arg7: memref<1x32xf32, #tpu.memory_space<vmem>>) attributes {dimension_semantics = [], scalar_prefetch = 0 : i64, scratch_operands = 0 : i64, tpu.core_type = #tpu.core_type<tc>} {
    %c0 = arith.constant 0 : index
    %c0_0 = arith.constant 0 : index
    %0 = vector.load %arg0[%c0, %c0_0] : memref<8x16xf32, #tpu.memory_space<vmem>>, vector<8x16xf32>
    %c0_1 = arith.constant 0 : index
    %c0_2 = arith.constant 0 : index
    %1 = vector.load %arg3[%c0_1, %c0_2] : memref<32x96xf32, #tpu.memory_space<vmem>>, vector<32x96xf32>
    %c0_3 = arith.constant 0 : index
    %c0_4 = arith.constant 0 : index
    %2 = vector.load %arg4[%c0_3, %c0_4] : memref<1x128xf32, #tpu.memory_space<vmem>>, vector<1x96xf32>
    %c0_5 = arith.constant 0 : index
    %c96 = arith.constant 96 : index
    %3 = vector.load %arg4[%c0_5, %c96] : memref<1x128xf32, #tpu.memory_space<vmem>>, vector<1x32xf32>
    %c0_6 = arith.constant 0 : index
    %c0_7 = arith.constant 0 : index
    %4 = vector.load %arg2[%c0_6, %c0_7] : memref<16x96xf32, #tpu.memory_space<vmem>>, vector<16x96xf32>
    %cst = arith.constant dense<0.000000e+00> : vector<8x96xf32>
    %5 = tpu.matmul %0, %4, %cst {dimension_numbers = #tpu.dot_dimension_numbers<[1], [0], [0], [1], [0, 0, 1, 1], [], []>} : vector<8x16xf32>, vector<16x96xf32>, vector<8x96xf32> -> vector<8x96xf32>
    %6 = vector.broadcast %2 : vector<1x96xf32> to vector<8x96xf32>
    %7 = arith.addf %5, %6 : vector<8x96xf32>
    %8 = vector.extract_strided_slice %7 {offsets = [0, 0], sizes = [8, 64], strides = [1, 1]} : vector<8x96xf32> to vector<8x64xf32>
    %9 = vector.extract_strided_slice %7 {offsets = [0, 64], sizes = [8, 32], strides = [1, 1]} : vector<8x96xf32> to vector<8x32xf32>
    %c0_8 = arith.constant 0 : index
    %c0_9 = arith.constant 0 : index
    %10 = vector.load %arg1[%c0_8, %c0_9] : memref<1x32xf32, #tpu.memory_space<vmem>>, vector<1x32xf32>
    %cst_10 = arith.constant dense<0.000000e+00> : vector<1x96xf32>
    %11 = tpu.matmul %10, %1, %cst_10 {dimension_numbers = #tpu.dot_dimension_numbers<[1], [0], [0], [1], [0, 0, 1, 1], [], []>} : vector<1x32xf32>, vector<32x96xf32>, vector<1x96xf32> -> vector<1x96xf32>
    %12 = vector.extract_strided_slice %8 {offsets = [0, 0], sizes = [1, 64], strides = [1, 1]} : vector<8x64xf32> to vector<1x64xf32>
    %13 = vector.extract_strided_slice %11 {offsets = [0, 0], sizes = [1, 64], strides = [1, 1]} : vector<1x96xf32> to vector<1x64xf32>
    %14 = arith.addf %12, %13 : vector<1x64xf32>
    %15 = arith.negf %14 : vector<1x64xf32>
    %16 = math.exp %15 : vector<1x64xf32>
    %cst_11 = arith.constant 1.000000e+00 : f32
    %17 = vector.broadcast %cst_11 : f32 to vector<1x64xf32>
    %18 = arith.addf %17, %16 : vector<1x64xf32>
    %19 = arith.divf %17, %18 : vector<1x64xf32>
    %20 = vector.extract_strided_slice %19 {offsets = [0, 0], sizes = [1, 32], strides = [1, 1]} : vector<1x64xf32> to vector<1x32xf32>
    %21 = vector.extract_strided_slice %19 {offsets = [0, 32], sizes = [1, 32], strides = [1, 1]} : vector<1x64xf32> to vector<1x32xf32>
    %22 = vector.extract_strided_slice %9 {offsets = [0, 0], sizes = [1, 32], strides = [1, 1]} : vector<8x32xf32> to vector<1x32xf32>
    %23 = vector.extract_strided_slice %11 {offsets = [0, 64], sizes = [1, 32], strides = [1, 1]} : vector<1x96xf32> to vector<1x32xf32>
    %24 = arith.addf %23, %3 : vector<1x32xf32>
    %25 = arith.mulf %20, %24 : vector<1x32xf32>
    %26 = arith.addf %22, %25 : vector<1x32xf32>
    %27 = math.tanh %26 : vector<1x32xf32>
    %28 = arith.subf %10, %27 : vector<1x32xf32>
    %29 = arith.mulf %21, %28 : vector<1x32xf32>
    %30 = arith.addf %27, %29 : vector<1x32xf32>
    %cst_12 = arith.constant dense<0.000000e+00> : vector<1x96xf32>
    %31 = tpu.matmul %30, %1, %cst_12 {dimension_numbers = #tpu.dot_dimension_numbers<[1], [0], [0], [1], [0, 0, 1, 1], [], []>} : vector<1x32xf32>, vector<32x96xf32>, vector<1x96xf32> -> vector<1x96xf32>
    %32 = vector.extract_strided_slice %8 {offsets = [1, 0], sizes = [1, 64], strides = [1, 1]} : vector<8x64xf32> to vector<1x64xf32>
    %33 = vector.extract_strided_slice %31 {offsets = [0, 0], sizes = [1, 64], strides = [1, 1]} : vector<1x96xf32> to vector<1x64xf32>
    %34 = arith.addf %32, %33 : vector<1x64xf32>
    %35 = arith.negf %34 : vector<1x64xf32>
    %36 = math.exp %35 : vector<1x64xf32>
    %cst_13 = arith.constant 1.000000e+00 : f32
    %37 = vector.broadcast %cst_13 : f32 to vector<1x64xf32>
    %38 = arith.addf %37, %36 : vector<1x64xf32>
    %39 = arith.divf %37, %38 : vector<1x64xf32>
    %40 = vector.extract_strided_slice %39 {offsets = [0, 0], sizes = [1, 32], strides = [1, 1]} : vector<1x64xf32> to vector<1x32xf32>
    %41 = vector.extract_strided_slice %39 {offsets = [0, 32], sizes = [1, 32], strides = [1, 1]} : vector<1x64xf32> to vector<1x32xf32>
    %42 = vector.extract_strided_slice %9 {offsets = [1, 0], sizes = [1, 32], strides = [1, 1]} : vector<8x32xf32> to vector<1x32xf32>
    %43 = vector.extract_strided_slice %31 {offsets = [0, 64], sizes = [1, 32], strides = [1, 1]} : vector<1x96xf32> to vector<1x32xf32>
    %44 = arith.addf %43, %3 : vector<1x32xf32>
    %45 = arith.mulf %40, %44 : vector<1x32xf32>
    %46 = arith.addf %42, %45 : vector<1x32xf32>
    %47 = math.tanh %46 : vector<1x32xf32>
    %48 = arith.subf %30, %47 : vector<1x32xf32>
    %49 = arith.mulf %41, %48 : vector<1x32xf32>
    %50 = arith.addf %47, %49 : vector<1x32xf32>
    %cst_14 = arith.constant dense<0.000000e+00> : vector<1x96xf32>
    %51 = tpu.matmul %50, %1, %cst_14 {dimension_numbers = #tpu.dot_dimension_numbers<[1], [0], [0], [1], [0, 0, 1, 1], [], []>} : vector<1x32xf32>, vector<32x96xf32>, vector<1x96xf32> -> vector<1x96xf32>
    %52 = vector.extract_strided_slice %8 {offsets = [2, 0], sizes = [1, 64], strides = [1, 1]} : vector<8x64xf32> to vector<1x64xf32>
    %53 = vector.extract_strided_slice %51 {offsets = [0, 0], sizes = [1, 64], strides = [1, 1]} : vector<1x96xf32> to vector<1x64xf32>
    %54 = arith.addf %52, %53 : vector<1x64xf32>
    %55 = arith.negf %54 : vector<1x64xf32>
    %56 = math.exp %55 : vector<1x64xf32>
    %cst_15 = arith.constant 1.000000e+00 : f32
    %57 = vector.broadcast %cst_15 : f32 to vector<1x64xf32>
    %58 = arith.addf %57, %56 : vector<1x64xf32>
    %59 = arith.divf %57, %58 : vector<1x64xf32>
    %60 = vector.extract_strided_slice %59 {offsets = [0, 0], sizes = [1, 32], strides = [1, 1]} : vector<1x64xf32> to vector<1x32xf32>
    %61 = vector.extract_strided_slice %59 {offsets = [0, 32], sizes = [1, 32], strides = [1, 1]} : vector<1x64xf32> to vector<1x32xf32>
    %62 = vector.extract_strided_slice %9 {offsets = [2, 0], sizes = [1, 32], strides = [1, 1]} : vector<8x32xf32> to vector<1x32xf32>
    %63 = vector.extract_strided_slice %51 {offsets = [0, 64], sizes = [1, 32], strides = [1, 1]} : vector<1x96xf32> to vector<1x32xf32>
    %64 = arith.addf %63, %3 : vector<1x32xf32>
    %65 = arith.mulf %60, %64 : vector<1x32xf32>
    %66 = arith.addf %62, %65 : vector<1x32xf32>
    %67 = math.tanh %66 : vector<1x32xf32>
    %68 = arith.subf %50, %67 : vector<1x32xf32>
    %69 = arith.mulf %61, %68 : vector<1x32xf32>
    %70 = arith.addf %67, %69 : vector<1x32xf32>
    %cst_16 = arith.constant dense<0.000000e+00> : vector<1x96xf32>
    %71 = tpu.matmul %70, %1, %cst_16 {dimension_numbers = #tpu.dot_dimension_numbers<[1], [0], [0], [1], [0, 0, 1, 1], [], []>} : vector<1x32xf32>, vector<32x96xf32>, vector<1x96xf32> -> vector<1x96xf32>
    %72 = vector.extract_strided_slice %8 {offsets = [3, 0], sizes = [1, 64], strides = [1, 1]} : vector<8x64xf32> to vector<1x64xf32>
    %73 = vector.extract_strided_slice %71 {offsets = [0, 0], sizes = [1, 64], strides = [1, 1]} : vector<1x96xf32> to vector<1x64xf32>
    %74 = arith.addf %72, %73 : vector<1x64xf32>
    %75 = arith.negf %74 : vector<1x64xf32>
    %76 = math.exp %75 : vector<1x64xf32>
    %cst_17 = arith.constant 1.000000e+00 : f32
    %77 = vector.broadcast %cst_17 : f32 to vector<1x64xf32>
    %78 = arith.addf %77, %76 : vector<1x64xf32>
    %79 = arith.divf %77, %78 : vector<1x64xf32>
    %80 = vector.extract_strided_slice %79 {offsets = [0, 0], sizes = [1, 32], strides = [1, 1]} : vector<1x64xf32> to vector<1x32xf32>
    %81 = vector.extract_strided_slice %79 {offsets = [0, 32], sizes = [1, 32], strides = [1, 1]} : vector<1x64xf32> to vector<1x32xf32>
    %82 = vector.extract_strided_slice %9 {offsets = [3, 0], sizes = [1, 32], strides = [1, 1]} : vector<8x32xf32> to vector<1x32xf32>
    %83 = vector.extract_strided_slice %71 {offsets = [0, 64], sizes = [1, 32], strides = [1, 1]} : vector<1x96xf32> to vector<1x32xf32>
    %84 = arith.addf %83, %3 : vector<1x32xf32>
    %85 = arith.mulf %80, %84 : vector<1x32xf32>
    %86 = arith.addf %82, %85 : vector<1x32xf32>
    %87 = math.tanh %86 : vector<1x32xf32>
    %88 = arith.subf %70, %87 : vector<1x32xf32>
    %89 = arith.mulf %81, %88 : vector<1x32xf32>
    %90 = arith.addf %87, %89 : vector<1x32xf32>
    %cst_18 = arith.constant dense<0.000000e+00> : vector<1x96xf32>
    %91 = tpu.matmul %90, %1, %cst_18 {dimension_numbers = #tpu.dot_dimension_numbers<[1], [0], [0], [1], [0, 0, 1, 1], [], []>} : vector<1x32xf32>, vector<32x96xf32>, vector<1x96xf32> -> vector<1x96xf32>
    %92 = vector.extract_strided_slice %8 {offsets = [4, 0], sizes = [1, 64], strides = [1, 1]} : vector<8x64xf32> to vector<1x64xf32>
    %93 = vector.extract_strided_slice %91 {offsets = [0, 0], sizes = [1, 64], strides = [1, 1]} : vector<1x96xf32> to vector<1x64xf32>
    %94 = arith.addf %92, %93 : vector<1x64xf32>
    %95 = arith.negf %94 : vector<1x64xf32>
    %96 = math.exp %95 : vector<1x64xf32>
    %cst_19 = arith.constant 1.000000e+00 : f32
    %97 = vector.broadcast %cst_19 : f32 to vector<1x64xf32>
    %98 = arith.addf %97, %96 : vector<1x64xf32>
    %99 = arith.divf %97, %98 : vector<1x64xf32>
    %100 = vector.extract_strided_slice %99 {offsets = [0, 0], sizes = [1, 32], strides = [1, 1]} : vector<1x64xf32> to vector<1x32xf32>
    %101 = vector.extract_strided_slice %99 {offsets = [0, 32], sizes = [1, 32], strides = [1, 1]} : vector<1x64xf32> to vector<1x32xf32>
    %102 = vector.extract_strided_slice %9 {offsets = [4, 0], sizes = [1, 32], strides = [1, 1]} : vector<8x32xf32> to vector<1x32xf32>
    %103 = vector.extract_strided_slice %91 {offsets = [0, 64], sizes = [1, 32], strides = [1, 1]} : vector<1x96xf32> to vector<1x32xf32>
    %104 = arith.addf %103, %3 : vector<1x32xf32>
    %105 = arith.mulf %100, %104 : vector<1x32xf32>
    %106 = arith.addf %102, %105 : vector<1x32xf32>
    %107 = math.tanh %106 : vector<1x32xf32>
    %108 = arith.subf %90, %107 : vector<1x32xf32>
    %109 = arith.mulf %101, %108 : vector<1x32xf32>
    %110 = arith.addf %107, %109 : vector<1x32xf32>
    %cst_20 = arith.constant dense<0.000000e+00> : vector<1x96xf32>
    %111 = tpu.matmul %110, %1, %cst_20 {dimension_numbers = #tpu.dot_dimension_numbers<[1], [0], [0], [1], [0, 0, 1, 1], [], []>} : vector<1x32xf32>, vector<32x96xf32>, vector<1x96xf32> -> vector<1x96xf32>
    %112 = vector.extract_strided_slice %8 {offsets = [5, 0], sizes = [1, 64], strides = [1, 1]} : vector<8x64xf32> to vector<1x64xf32>
    %113 = vector.extract_strided_slice %111 {offsets = [0, 0], sizes = [1, 64], strides = [1, 1]} : vector<1x96xf32> to vector<1x64xf32>
    %114 = arith.addf %112, %113 : vector<1x64xf32>
    %115 = arith.negf %114 : vector<1x64xf32>
    %116 = math.exp %115 : vector<1x64xf32>
    %cst_21 = arith.constant 1.000000e+00 : f32
    %117 = vector.broadcast %cst_21 : f32 to vector<1x64xf32>
    %118 = arith.addf %117, %116 : vector<1x64xf32>
    %119 = arith.divf %117, %118 : vector<1x64xf32>
    %120 = vector.extract_strided_slice %119 {offsets = [0, 0], sizes = [1, 32], strides = [1, 1]} : vector<1x64xf32> to vector<1x32xf32>
    %121 = vector.extract_strided_slice %119 {offsets = [0, 32], sizes = [1, 32], strides = [1, 1]} : vector<1x64xf32> to vector<1x32xf32>
    %122 = vector.extract_strided_slice %9 {offsets = [5, 0], sizes = [1, 32], strides = [1, 1]} : vector<8x32xf32> to vector<1x32xf32>
    %123 = vector.extract_strided_slice %111 {offsets = [0, 64], sizes = [1, 32], strides = [1, 1]} : vector<1x96xf32> to vector<1x32xf32>
    %124 = arith.addf %123, %3 : vector<1x32xf32>
    %125 = arith.mulf %120, %124 : vector<1x32xf32>
    %126 = arith.addf %122, %125 : vector<1x32xf32>
    %127 = math.tanh %126 : vector<1x32xf32>
    %128 = arith.subf %110, %127 : vector<1x32xf32>
    %129 = arith.mulf %121, %128 : vector<1x32xf32>
    %130 = arith.addf %127, %129 : vector<1x32xf32>
    %cst_22 = arith.constant dense<0.000000e+00> : vector<1x96xf32>
    %131 = tpu.matmul %130, %1, %cst_22 {dimension_numbers = #tpu.dot_dimension_numbers<[1], [0], [0], [1], [0, 0, 1, 1], [], []>} : vector<1x32xf32>, vector<32x96xf32>, vector<1x96xf32> -> vector<1x96xf32>
    %132 = vector.extract_strided_slice %8 {offsets = [6, 0], sizes = [1, 64], strides = [1, 1]} : vector<8x64xf32> to vector<1x64xf32>
    %133 = vector.extract_strided_slice %131 {offsets = [0, 0], sizes = [1, 64], strides = [1, 1]} : vector<1x96xf32> to vector<1x64xf32>
    %134 = arith.addf %132, %133 : vector<1x64xf32>
    %135 = arith.negf %134 : vector<1x64xf32>
    %136 = math.exp %135 : vector<1x64xf32>
    %cst_23 = arith.constant 1.000000e+00 : f32
    %137 = vector.broadcast %cst_23 : f32 to vector<1x64xf32>
    %138 = arith.addf %137, %136 : vector<1x64xf32>
    %139 = arith.divf %137, %138 : vector<1x64xf32>
    %140 = vector.extract_strided_slice %139 {offsets = [0, 0], sizes = [1, 32], strides = [1, 1]} : vector<1x64xf32> to vector<1x32xf32>
    %141 = vector.extract_strided_slice %139 {offsets = [0, 32], sizes = [1, 32], strides = [1, 1]} : vector<1x64xf32> to vector<1x32xf32>
    %142 = vector.extract_strided_slice %9 {offsets = [6, 0], sizes = [1, 32], strides = [1, 1]} : vector<8x32xf32> to vector<1x32xf32>
    %143 = vector.extract_strided_slice %131 {offsets = [0, 64], sizes = [1, 32], strides = [1, 1]} : vector<1x96xf32> to vector<1x32xf32>
    %144 = arith.addf %143, %3 : vector<1x32xf32>
    %145 = arith.mulf %140, %144 : vector<1x32xf32>
    %146 = arith.addf %142, %145 : vector<1x32xf32>
    %147 = math.tanh %146 : vector<1x32xf32>
    %148 = arith.subf %130, %147 : vector<1x32xf32>
    %149 = arith.mulf %141, %148 : vector<1x32xf32>
    %150 = arith.addf %147, %149 : vector<1x32xf32>
    %cst_24 = arith.constant dense<0.000000e+00> : vector<1x96xf32>
    %151 = tpu.matmul %150, %1, %cst_24 {dimension_numbers = #tpu.dot_dimension_numbers<[1], [0], [0], [1], [0, 0, 1, 1], [], []>} : vector<1x32xf32>, vector<32x96xf32>, vector<1x96xf32> -> vector<1x96xf32>
    %152 = vector.extract_strided_slice %8 {offsets = [7, 0], sizes = [1, 64], strides = [1, 1]} : vector<8x64xf32> to vector<1x64xf32>
    %153 = vector.extract_strided_slice %151 {offsets = [0, 0], sizes = [1, 64], strides = [1, 1]} : vector<1x96xf32> to vector<1x64xf32>
    %154 = arith.addf %152, %153 : vector<1x64xf32>
    %155 = arith.negf %154 : vector<1x64xf32>
    %156 = math.exp %155 : vector<1x64xf32>
    %cst_25 = arith.constant 1.000000e+00 : f32
    %157 = vector.broadcast %cst_25 : f32 to vector<1x64xf32>
    %158 = arith.addf %157, %156 : vector<1x64xf32>
    %159 = arith.divf %157, %158 : vector<1x64xf32>
    %160 = vector.extract_strided_slice %159 {offsets = [0, 0], sizes = [1, 32], strides = [1, 1]} : vector<1x64xf32> to vector<1x32xf32>
    %161 = vector.extract_strided_slice %159 {offsets = [0, 32], sizes = [1, 32], strides = [1, 1]} : vector<1x64xf32> to vector<1x32xf32>
    %162 = vector.extract_strided_slice %9 {offsets = [7, 0], sizes = [1, 32], strides = [1, 1]} : vector<8x32xf32> to vector<1x32xf32>
    %163 = vector.extract_strided_slice %151 {offsets = [0, 64], sizes = [1, 32], strides = [1, 1]} : vector<1x96xf32> to vector<1x32xf32>
    %164 = arith.addf %163, %3 : vector<1x32xf32>
    %165 = arith.mulf %160, %164 : vector<1x32xf32>
    %166 = arith.addf %162, %165 : vector<1x32xf32>
    %167 = math.tanh %166 : vector<1x32xf32>
    %168 = arith.subf %150, %167 : vector<1x32xf32>
    %169 = arith.mulf %161, %168 : vector<1x32xf32>
    %170 = arith.addf %167, %169 : vector<1x32xf32>
    %c0_26 = arith.constant 0 : index
    %c0_27 = arith.constant 0 : index
    %171 = vector.load %arg7[%c0_26, %c0_27] : memref<1x32xf32, #tpu.memory_space<vmem>>, vector<1x32xf32>
    tpu.vector_store %arg7[%c0_26, %c0_27], %170 {strides = array<i32>} : memref<1x32xf32, #tpu.memory_space<vmem>>, vector<1x32xf32>,
    %c0_28 = arith.constant 0 : index
    %c0_29 = arith.constant 0 : index
    %172 = vector.load %arg5[%c0_28, %c0_29] : memref<33x16xf32, #tpu.memory_space<vmem>>, vector<32x16xf32>
    %cst_30 = arith.constant dense<0.000000e+00> : vector<1x16xf32>
    %173 = tpu.matmul %30, %172, %cst_30 {dimension_numbers = #tpu.dot_dimension_numbers<[1], [0], [0], [1], [0, 0, 1, 1], [], []>} : vector<1x32xf32>, vector<32x16xf32>, vector<1x16xf32> -> vector<1x16xf32>
    %c32 = arith.constant 32 : index
    %c0_31 = arith.constant 0 : index
    %174 = vector.load %arg5[%c32, %c0_31] : memref<33x16xf32, #tpu.memory_space<vmem>>, vector<1x16xf32>
    %175 = arith.addf %173, %174 : vector<1x16xf32>
    %cst_32 = arith.constant dense<0xFF800000> : vector<1xf32>
    %176 = vector.multi_reduction <maximumf>, %175, %cst_32 [1] : vector<1x16xf32> to vector<1xf32>
    %177 = vector.shape_cast %176 : vector<1xf32> to vector<1x1xf32>
    %178 = vector.broadcast %177 : vector<1x1xf32> to vector<1x16xf32>
    %179 = arith.subf %175, %178 : vector<1x16xf32>
    %180 = math.exp %179 : vector<1x16xf32>
    %cst_33 = arith.constant dense<0.000000e+00> : vector<1xf32>
    %181 = vector.multi_reduction <add>, %180, %cst_33 [1] : vector<1x16xf32> to vector<1xf32>
    %182 = vector.shape_cast %181 : vector<1xf32> to vector<1x1xf32>
    %183 = math.log %182 : vector<1x1xf32>
    %184 = vector.broadcast %177 : vector<1x1xf32> to vector<1x16xf32>
    %185 = arith.subf %175, %184 : vector<1x16xf32>
    %186 = vector.broadcast %183 : vector<1x1xf32> to vector<1x16xf32>
    %187 = arith.subf %185, %186 : vector<1x16xf32>
    %c0_34 = arith.constant 0 : index
    %c0_35 = arith.constant 0 : index
    %188 = vector.load %arg6[%c0_34, %c0_35] : memref<1x16xf32, #tpu.memory_space<vmem>>, vector<1x16xf32>
    tpu.vector_store %arg6[%c0_34, %c0_35], %187 {strides = array<i32>} : memref<1x16xf32, #tpu.memory_space<vmem>>, vector<1x16xf32>,
    return
  }
}

</mosaic_0001>

<llo_original>
// kernel: decoder_forward.1
$region0: #{decoder_forward.1}
  #allocation0 [shape = 'u32[]', space=smem, size = 0x4, offset = 0x4, fixed_abs, tag = 'smem constant byte address 0x4 - core index']
  #allocation1 [shape = 'u32[144,128]{1,0:T(1,128)}', space=vmem, size = 0x12000, scoped, tag = 'internal scratch']
  %s0 = inlined_call_operand.vmem [shape: f32[8,16], index: 0, kind: input, shape index: {}]
  %s1 = inlined_call_operand.vmem [shape: f32[1,32], index: 1, kind: input, shape index: {}]
  %s2 = inlined_call_operand.vmem [shape: f32[16,96], index: 2, kind: input, shape index: {}]
  %s3 = inlined_call_operand.vmem [shape: f32[32,96], index: 3, kind: input, shape index: {}]
  %s4 = inlined_call_operand.vmem [shape: f32[1,128], index: 4, kind: input, shape index: {}]
  %s5 = inlined_call_operand.vmem [shape: f32[33,16], index: 5, kind: input, shape index: {}]
  %s6 = inlined_call_operand.hbm [shape: f32[1,16], index: 6, kind: output, shape index: {0}]
  %s7 = inlined_call_operand.hbm [shape: f32[1,32], index: 7, kind: output, shape index: {1}]
  %8 = xla_tuple %s6, %s7
  %s9 = sld [smem:[#allocation0]]
  $region42: #{decoder_forward.1} parent=0
    _
  %s11 = ssub.s32 1, %s9
  %s12 = scalar_select 0, %s11, %s9
  $region1: #{decoder_forward.1} parent=0
    #allocation2 [shape = 'u8[512]{0}', space=vmem, size = 0x400, scoped, tag = 'output window, operand 0, single buffered']
    #allocation3 [shape = 's32[1]{0}', space=sflag, size = 0x4, scoped, tag = 'scoped memory for decoder_forward.1']
    #allocation4 [shape = 'u8[512]{0}', space=vmem, size = 0x400, scoped, tag = 'output window, operand 1, single buffered']
    #allocation5 [shape = 's32[1]{0}', space=sflag, size = 0x4, scoped, tag = 'scoped memory for decoder_forward.1']
    %13 = vsyncpa [#allocation3], 0
    %14 = vsyncpa [#allocation5], 0
    // Predicated region
    $region2: #{decoder_forward.1} parent=1 // pred_check
      _
    $region3: #{decoder_forward.1} parent=1 // pred_check_branch
      %16 = sbr.rel (0) target = $region5
    $region4: #{decoder_forward.1} parent=1 // pred_region
      _
    $region5: #{decoder_forward.1} parent=1 // pred_fallthru
      _
    // Predicated region
    $region6: #{decoder_forward.1} parent=1 // pred_check
      _
    $region7: #{decoder_forward.1} parent=1 // pred_check_branch
      %18 = sbr.rel (0) target = $region9
    $region8: #{decoder_forward.1} parent=1 // pred_region
      _
    $region9: #{decoder_forward.1} parent=1 // pred_fallthru
      _
    // Predicated region
    $region10: #{decoder_forward.1} parent=1 // pred_check
      _
    $region11: #{decoder_forward.1} parent=1 // pred_check_branch
      %20 = sbr.rel (0) target = $region13
    $region12: #{decoder_forward.1} parent=1 // pred_region
      _
    $region13: #{decoder_forward.1} parent=1 // pred_fallthru
      _
    // Predicated region
    $region14: #{decoder_forward.1} parent=1 // pred_check
      _
    $region15: #{decoder_forward.1} parent=1 // pred_check_branch
      %22 = sbr.rel (0) target = $region17
    $region16: #{decoder_forward.1} parent=1 // pred_region
      _
    $region17: #{decoder_forward.1} parent=1 // pred_fallthru
      _
    // Predicated region
    $region18: #{decoder_forward.1} parent=1 // pred_check
      _
    $region19: #{decoder_forward.1} parent=1 // pred_check_branch
      %24 = sbr.rel (0) target = $region21
    $region20: #{decoder_forward.1} parent=1 // pred_region
      _
    $region21: #{decoder_forward.1} parent=1 // pred_fallthru
      _
    // Predicated region
    $region22: #{decoder_forward.1} parent=1 // pred_check
      _
    $region23: #{decoder_forward.1} parent=1 // pred_check_branch
      %26 = sbr.rel (0) target = $region25
    $region24: #{decoder_forward.1} parent=1 // pred_region
      _
    $region25: #{decoder_forward.1} parent=1 // pred_fallthru
      _
    %v27 = vld [vmem:[%s0] sm:$0xff]
    %v28 = vld [vmem:[%s3] sm:$0xff]
    %v29 = vld [vmem:[%s3 + $0x8] sm:$0xff]
    %v30 = vld [vmem:[%s3 + $0x10] sm:$0xff]
    %v31 = vld [vmem:[%s3 + $0x18] sm:$0xff]
    %v32 = vld [vmem:[%s4] sm:$0x1]
    %v33 = vld [vmem:[%s2] sm:$0xff]
    %v34 = vld [vmem:[%s2 + $0x8] sm:$0xff]
    %v36 = vlaneseq
    %v37 = vshrl.u32 %v36, 7
    %v38 = vsub.s32 0, %v37
    %v39 = vrot.slane %v32, %v38
    %vm41 = vcmask 130048
    %v43 = vsel %vm41, %v27, 0
    %45 = vmatprep.subr.mxu0 0.0
    %46 = vmatpush1.msra.mxu0 0.0
    %47 = vmatprep.subr.mxu0 0.0
    %48 = vmatpush1.msra.mxu0 0.0
    %49 = vmatprep.subr.mxu0 0.0
    %50 = vmatpush1.msra.mxu0 0.0
    %51 = vmatprep.subr.mxu0 0.0
    %52 = vmatpush1.msra.mxu0 0.0
    %53 = vmatprep.subr.mxu0 0.0
    %54 = vmatpush1.msra.mxu0 0.0
    %55 = vmatprep.subr.mxu0 0.0
    %56 = vmatpush1.msra.mxu0 0.0
    %57 = vmatprep.subr.mxu0 0.0
    %58 = vmatpush1.msra.mxu0 0.0
    %59 = vmatprep.subr.mxu0 0.0
    %60 = vmatpush1.msra.mxu0 0.0
    %61 = vmatprep.subr.mxu0 0.0
    %62 = vmatpush1.msra.mxu0 0.0
    %63 = vmatprep.subr.mxu0 0.0
    %64 = vmatpush1.msra.mxu0 0.0
    %65 = vmatprep.subr.mxu0 0.0
    %66 = vmatpush1.msra.mxu0 0.0
    %67 = vmatprep.subr.mxu0 0.0
    %68 = vmatpush1.msra.mxu0 0.0
    %69 = vmatprep.subr.mxu0 0.0
    %70 = vmatpush1.msra.mxu0 0.0
    %71 = vmatprep.subr.mxu0 0.0
    %72 = vmatpush1.msra.mxu0 0.0
    %73 = vmatprep.subr.mxu0 0.0
    %74 = vmatpush1.msra.mxu0 %v34
    %75 = vmatprep.subr.mxu0 0.0
    %76 = vmatpush1.msra.mxu0 %v33
    %77 = vmatprep.subr.mxu0 0.0
    %78 = vmatpush2.msra.mxu0 0.0
    %79 = vmatprep.subr.mxu0 0.0
    %80 = vmatpush2.msra.mxu0 0.0
    %81 = vmatprep.subr.mxu0 0.0
    %82 = vmatpush2.msra.mxu0 0.0
    %83 = vmatprep.subr.mxu0 0.0
    %84 = vmatpush2.msra.mxu0 0.0
    %85 = vmatprep.subr.mxu0 0.0
    %86 = vmatpush2.msra.mxu0 0.0
    %87 = vmatprep.subr.mxu0 0.0
    %88 = vmatpush2.msra.mxu0 0.0
    %89 = vmatprep.subr.mxu0 0.0
    %90 = vmatpush2.msra.mxu0 0.0
    %91 = vmatprep.subr.mxu0 0.0
    %92 = vmatpush2.msra.mxu0 0.0
    %93 = vmatprep.subr.mxu0 0.0
    %94 = vmatpush2.msra.mxu0 0.0
    %95 = vmatprep.subr.mxu0 0.0
    %96 = vmatpush2.msra.mxu0 0.0
    %97 = vmatprep.subr.mxu0 0.0
    %98 = vmatpush2.msra.mxu0 0.0
    %99 = vmatprep.subr.mxu0 0.0
    %100 = vmatpush2.msra.mxu0 0.0
    %101 = vmatprep.subr.mxu0 0.0
    %102 = vmatpush2.msra.mxu0 0.0
    %103 = vmatprep.subr.mxu0 0.0
    %104 = vmatpush2.msra.mxu0 0.0
    %105 = vmatprep.subr.mxu0 0.0
    %106 = vmatpush2.msra.mxu0 0.0
    %107 = vmatprep.subr.mxu0 0.0
    %108 = vmatpush2.msra.mxu0 0.0
    %109 = vmatprep.mubr.f32.mxu0 0.0
    %110 = vmatmul.mubr.f32.gmra.mxu0 %v43
    %v111 = vpop.f32.mrf.mxu0
    %v112 = vadd.f32 %v39, %v111
    %v113 = vpop.f32.mrf.mxu0
    %114 = vdwg.mxu0
    %v115 = vld [vmem:[%s1] sm:$0x1]
    %vm116 = vcmask 261120
    %v118 = vsel %vm116, %v115, 0
    %120 = vmatprep.subr.mxu0 0.0
    %121 = vmatpush1.msra.mxu0 0.0
    %122 = vmatprep.subr.mxu0 0.0
    %123 = vmatpush1.msra.mxu0 0.0
    %124 = vmatprep.subr.mxu0 0.0
    %125 = vmatpush1.msra.mxu0 0.0
    %126 = vmatprep.subr.mxu0 0.0
    %127 = vmatpush1.msra.mxu0 0.0
    %128 = vmatprep.subr.mxu0 0.0
    %129 = vmatpush1.msra.mxu0 0.0
    %130 = vmatprep.subr.mxu0 0.0
    %131 = vmatpush1.msra.mxu0 0.0
    %132 = vmatprep.subr.mxu0 0.0
    %133 = vmatpush1.msra.mxu0 0.0
    %134 = vmatprep.subr.mxu0 0.0
    %135 = vmatpush1.msra.mxu0 0.0
    %136 = vmatprep.subr.mxu0 0.0
    %137 = vmatpush1.msra.mxu0 0.0
    %138 = vmatprep.subr.mxu0 0.0
    %139 = vmatpush1.msra.mxu0 0.0
    %140 = vmatprep.subr.mxu0 0.0
    %141 = vmatpush1.msra.mxu0 0.0
    %142 = vmatprep.subr.mxu0 0.0
    %143 = vmatpush1.msra.mxu0 0.0
    %144 = vmatprep.subr.mxu0 0.0
    %145 = vmatpush1.msra.mxu0 %v31
    %146 = vmatprep.subr.mxu0 0.0
    %147 = vmatpush1.msra.mxu0 %v30
    %148 = vmatprep.subr.mxu0 0.0
    %149 = vmatpush1.msra.mxu0 %v29
    %150 = vmatprep.subr.mxu0 0.0
    %151 = vmatpush1.msra.mxu0 %v28
    %152 = vmatprep.subr.mxu0 0.0
    %153 = vmatpush2.msra.mxu0 0.0
    %154 = vmatprep.subr.mxu0 0.0
    %155 = vmatpush2.msra.mxu0 0.0
    %156 = vmatprep.subr.mxu0 0.0
    %157 = vmatpush2.msra.mxu0 0.0
    %158 = vmatprep.subr.mxu0 0.0
    %159 = vmatpush2.msra.mxu0 0.0
    %160 = vmatprep.subr.mxu0 0.0
    %161 = vmatpush2.msra.mxu0 0.0
    %162 = vmatprep.subr.mxu0 0.0
    %163 = vmatpush2.msra.mxu0 0.0
    %164 = vmatprep.subr.mxu0 0.0
    %165 = vmatpush2.msra.mxu0 0.0
    %166 = vmatprep.subr.mxu0 0.0
    %167 = vmatpush2.msra.mxu0 0.0
    %168 = vmatprep.subr.mxu0 0.0
    %169 = vmatpush2.msra.mxu0 0.0
    %170 = vmatprep.subr.mxu0 0.0
    %171 = vmatpush2.msra.mxu0 0.0
    %172 = vmatprep.subr.mxu0 0.0
    %173 = vmatpush2.msra.mxu0 0.0
    %174 = vmatprep.subr.mxu0 0.0
    %175 = vmatpush2.msra.mxu0 0.0
    %176 = vmatprep.subr.mxu0 0.0
    %177 = vmatpush2.msra.mxu0 0.0
    %178 = vmatprep.subr.mxu0 0.0
    %179 = vmatpush2.msra.mxu0 0.0
    %180 = vmatprep.subr.mxu0 0.0
    %181 = vmatpush2.msra.mxu0 0.0
    %182 = vmatprep.subr.mxu0 0.0
    %183 = vmatpush2.msra.mxu0 0.0
    %184 = vmatprep.mubr.f32.mxu0 0.0
    %185 = vmatmul.mubr.f32.gmra.mxu0 %v118
    %v186 = vpop.f32.mrf.mxu0
    %v187 = vadd.f32 0.0, %v186
    %v188 = vpop.f32.mrf.mxu0
    %189 = vdwg.mxu0
    %v190 = vadd.f32 %v112, %v187
    %v191 = vxor.u32 %v190, 2147483648
    %v192 = vmul.f32 %v191, 1.442695
    %v193 = vpow.pop %v192
    %v194 = vadd.f32 %v193, 1.0
    %v195 = vrcp.pop %v194
    %v196 = vmul.f32 1.0, %v195
    %197 = vrot.lane.b32.xlu0 %v39, 96
    %v198 = vpop.permute.xlu0 %197
    %v200 = vadd.f32 %v187, %v198
    %202 = vrot.lane.b32.xlu0 %v200, 64
    %v203 = vpop.permute.xlu0 %202
    %v205 = vmul.f32 %v196, %v203
    %207 = vrot.lane.b32.xlu0 %v205, 64
    %v208 = vpop.permute.xlu0 %207
    %v210 = vadd.f32 %v112, %v208
    %v211 = vtanh.pop %v210
    %v214 = vunpack.c.l.s4 1966171168
    %v215 = vunpack.c.0.s8 %v214
    %v216 = vlaneseq
    %v217 = vshrl.u32 %v216, 7
    %v218 = vsub.s32 %v215, %v217
    %v219 = vrot.slane %v211, %v218
    %v221 = vunpack.c.l.s4 1966171168
    %v222 = vunpack.c.0.s8 %v221
    %v223 = vlaneseq
    %v224 = vshrl.u32 %v223, 7
    %v225 = vsub.s32 %v222, %v224
    %v226 = vrot.slane %v219, %v225
    %227 = vrot.lane.b32.xlu0 %v226, 64
    %v228 = vpop.permute.xlu0 %227
    %v230 = vsub.f32 %v115, %v228
    %v232 = vlaneseq
    %v233 = vshrl.u32 %v232, 7
    %v234 = vsub.s32 0, %v233
    %v235 = vrot.slane %v230, %v234
    %236 = vrot.lane.b32.xlu0 %v235, 32
    %v237 = vpop.permute.xlu0 %236
    %v239 = vmul.f32 %v196, %v237
    %241 = vrot.lane.b32.xlu0 %v239, 32
    %v242 = vpop.permute.xlu0 %241
    %v244 = vadd.f32 %v211, %v242
    %246 = vrot.lane.b32.xlu0 %v244, 64
    %v247 = vpop.permute.xlu0 %246
    %v248 = vsel %vm116, %v247, 0
    %250 = vmatprep.subr.mxu0 0.0
    %251 = vmatpush1.msra.mxu0 0.0
    %252 = vmatprep.subr.mxu0 0.0
    %253 = vmatpush1.msra.mxu0 0.0
    %254 = vmatprep.subr.mxu0 0.0
    %255 = vmatpush1.msra.mxu0 0.0
    %256 = vmatprep.subr.mxu0 0.0
    %257 = vmatpush1.msra.mxu0 0.0
    %258 = vmatprep.subr.mxu0 0.0
    %259 = vmatpush1.msra.mxu0 0.0
    %260 = vmatprep.subr.mxu0 0.0
    %261 = vmatpush1.msra.mxu0 0.0
    %262 = vmatprep.subr.mxu0 0.0
    %263 = vmatpush1.msra.mxu0 0.0
    %264 = vmatprep.subr.mxu0 0.0
    %265 = vmatpush1.msra.mxu0 0.0
    %266 = vmatprep.subr.mxu0 0.0
    %267 = vmatpush1.msra.mxu0 0.0
    %268 = vmatprep.subr.mxu0 0.0
    %269 = vmatpush1.msra.mxu0 0.0
    %270 = vmatprep.subr.mxu0 0.0
    %271 = vmatpush1.msra.mxu0 0.0
    %272 = vmatprep.subr.mxu0 0.0
    %273 = vmatpush1.msra.mxu0 0.0
    %274 = vmatprep.subr.mxu0 0.0
    %275 = vmatpush1.msra.mxu0 %v31
    %276 = vmatprep.subr.mxu0 0.0
    %277 = vmatpush1.msra.mxu0 %v30
    %278 = vmatprep.subr.mxu0 0.0
    %279 = vmatpush1.msra.mxu0 %v29
    %280 = vmatprep.subr.mxu0 0.0
    %281 = vmatpush1.msra.mxu0 %v28
    %282 = vmatprep.subr.mxu0 0.0
    %283 = vmatpush2.msra.mxu0 0.0
    %284 = vmatprep.subr.mxu0 0.0
    %285 = vmatpush2.msra.mxu0 0.0
    %286 = vmatprep.subr.mxu0 0.0
    %287 = vmatpush2.msra.mxu0 0.0
    %288 = vmatprep.subr.mxu0 0.0
    %289 = vmatpush2.msra.mxu0 0.0
    %290 = vmatprep.subr.mxu0 0.0
    %291 = vmatpush2.msra.mxu0 0.0
    %292 = vmatprep.subr.mxu0 0.0
    %293 = vmatpush2.msra.mxu0 0.0
    %294 = vmatprep.subr.mxu0 0.0
    %295 = vmatpush2.msra.mxu0 0.0
    %296 = vmatprep.subr.mxu0 0.0
    %297 = vmatpush2.msra.mxu0 0.0
    %298 = vmatprep.subr.mxu0 0.0
    %299 = vmatpush2.msra.mxu0 0.0
    %300 = vmatprep.subr.mxu0 0.0
    %301 = vmatpush2.msra.mxu0 0.0
    %302 = vmatprep.subr.mxu0 0.0
    %303 = vmatpush2.msra.mxu0 0.0
    %304 = vmatprep.subr.mxu0 0.0
    %305 = vmatpush2.msra.mxu0 0.0
    %306 = vmatprep.subr.mxu0 0.0
    %307 = vmatpush2.msra.mxu0 0.0
    %308 = vmatprep.subr.mxu0 0.0
    %309 = vmatpush2.msra.mxu0 0.0
    %310 = vmatprep.subr.mxu0 0.0
    %311 = vmatpush2.msra.mxu0 0.0
    %312 = vmatprep.subr.mxu0 0.0
    %313 = vmatpush2.msra.mxu0 0.0
    %314 = vmatprep.mubr.f32.mxu0 0.0
    %315 = vmatmul.mubr.f32.gmra.mxu0 %v248
    %v316 = vpop.f32.mrf.mxu0
    %v317 = vadd.f32 0.0, %v316
    %v318 = vpop.f32.mrf.mxu0
    %319 = vdwg.mxu0
    %v321 = vrot.slane %v317, 7
    %v323 = vadd.f32 %v112, %v321
    %v324 = vxor.u32 %v323, 2147483648
    %v325 = vmul.f32 %v324, 1.442695
    %v326 = vpow.pop %v325
    %v327 = vadd.f32 %v326, 1.0
    %v328 = vrcp.pop %v327
    %v329 = vmul.f32 1.0, %v328
    %v330 = vadd.f32 %v317, %v198
    %v332 = vrot.slane %v330, 7
    %333 = vrot.lane.b32.xlu0 %v332, 64
    %v334 = vpop.permute.xlu0 %333
    %v336 = vmul.f32 %v329, %v334
    %338 = vrot.lane.b32.xlu0 %v336, 64
    %v339 = vpop.permute.xlu0 %338
    %v341 = vadd.f32 %v112, %v339
    %v342 = vtanh.pop %v341
    %v344 = vrot.slane %v342, 1
    %v346 = vsub.f32 %v244, %v344
    %v348 = vrot.slane %v346, 7
    %349 = vrot.lane.b32.xlu0 %v348, 96
    %v350 = vpop.permute.xlu0 %349
    %v352 = vmul.f32 %v329, %v350
    %354 = vrot.lane.b32.xlu0 %v352, 32
    %v355 = vpop.permute.xlu0 %354
    %v357 = vadd.f32 %v342, %v355
    %v359 = vrot.slane %v357, 1
    %360 = vrot.lane.b32.xlu0 %v359, 64
    %v361 = vpop.permute.xlu0 %360
    %v362 = vsel %vm116, %v361, 0
    %364 = vmatprep.subr.mxu0 0.0
    %365 = vmatpush1.msra.mxu0 0.0
    %366 = vmatprep.subr.mxu0 0.0
    %367 = vmatpush1.msra.mxu0 0.0
    %368 = vmatprep.subr.mxu0 0.0
    %369 = vmatpush1.msra.mxu0 0.0
    %370 = vmatprep.subr.mxu0 0.0
    %371 = vmatpush1.msra.mxu0 0.0
    %372 = vmatprep.subr.mxu0 0.0
    %373 = vmatpush1.msra.mxu0 0.0
    %374 = vmatprep.subr.mxu0 0.0
    %375 = vmatpush1.msra.mxu0 0.0
    %376 = vmatprep.subr.mxu0 0.0
    %377 = vmatpush1.msra.mxu0 0.0
    %378 = vmatprep.subr.mxu0 0.0
    %379 = vmatpush1.msra.mxu0 0.0
    %380 = vmatprep.subr.mxu0 0.0
    %381 = vmatpush1.msra.mxu0 0.0
    %382 = vmatprep.subr.mxu0 0.0
    %383 = vmatpush1.msra.mxu0 0.0
    %384 = vmatprep.subr.mxu0 0.0
    %385 = vmatpush1.msra.mxu0 0.0
    %386 = vmatprep.subr.mxu0 0.0
    %387 = vmatpush1.msra.mxu0 0.0
    %388 = vmatprep.subr.mxu0 0.0
    %389 = vmatpush1.msra.mxu0 %v31
    %390 = vmatprep.subr.mxu0 0.0
    %391 = vmatpush1.msra.mxu0 %v30
    %392 = vmatprep.subr.mxu0 0.0
    %393 = vmatpush1.msra.mxu0 %v29
    %394 = vmatprep.subr.mxu0 0.0
    %395 = vmatpush1.msra.mxu0 %v28
    %396 = vmatprep.subr.mxu0 0.0
    %397 = vmatpush2.msra.mxu0 0.0
    %398 = vmatprep.subr.mxu0 0.0
    %399 = vmatpush2.msra.mxu0 0.0
    %400 = vmatprep.subr.mxu0 0.0
    %401 = vmatpush2.msra.mxu0 0.0
    %402 = vmatprep.subr.mxu0 0.0
    %403 = vmatpush2.msra.mxu0 0.0
    %404 = vmatprep.subr.mxu0 0.0
    %405 = vmatpush2.msra.mxu0 0.0
    %406 = vmatprep.subr.mxu0 0.0
    %407 = vmatpush2.msra.mxu0 0.0
    %408 = vmatprep.subr.mxu0 0.0
    %409 = vmatpush2.msra.mxu0 0.0
    %410 = vmatprep.subr.mxu0 0.0
    %411 = vmatpush2.msra.mxu0 0.0
    %412 = vmatprep.subr.mxu0 0.0
    %413 = vmatpush2.msra.mxu0 0.0
    %414 = vmatprep.subr.mxu0 0.0
    %415 = vmatpush2.msra.mxu0 0.0
    %416 = vmatprep.subr.mxu0 0.0
    %417 = vmatpush2.msra.mxu0 0.0
    %418 = vmatprep.subr.mxu0 0.0
    %419 = vmatpush2.msra.mxu0 0.0
    %420 = vmatprep.subr.mxu0 0.0
    %421 = vmatpush2.msra.mxu0 0.0
    %422 = vmatprep.subr.mxu0 0.0
    %423 = vmatpush2.msra.mxu0 0.0
    %424 = vmatprep.subr.mxu0 0.0
    %425 = vmatpush2.msra.mxu0 0.0
    %426 = vmatprep.subr.mxu0 0.0
    %427 = vmatpush2.msra.mxu0 0.0
    %428 = vmatprep.mubr.f32.mxu0 0.0
    %429 = vmatmul.mubr.f32.gmra.mxu0 %v362
    %v430 = vpop.f32.mrf.mxu0
    %v431 = vadd.f32 0.0, %v430
    %v432 = vpop.f32.mrf.mxu0
    %433 = vdwg.mxu0
    %v435 = vrot.slane %v431, 6
    %v437 = vadd.f32 %v112, %v435
    %v438 = vxor.u32 %v437, 2147483648
    %v439 = vmul.f32 %v438, 1.442695
    %v440 = vpow.pop %v439
    %v441 = vadd.f32 %v440, 1.0
    %v442 = vrcp.pop %v441
    %v443 = vmul.f32 1.0, %v442
    %v444 = vadd.f32 %v431, %v198
    %v446 = vrot.slane %v444, 6
    %447 = vrot.lane.b32.xlu0 %v446, 64
    %v448 = vpop.permute.xlu0 %447
    %v450 = vmul.f32 %v443, %v448
    %452 = vrot.lane.b32.xlu0 %v450, 64
    %v453 = vpop.permute.xlu0 %452
    %v455 = vadd.f32 %v112, %v453
    %v456 = vtanh.pop %v455
    %v458 = vrot.slane %v456, 1
    %v460 = vsub.f32 %v357, %v458
    %v462 = vrot.slane %v460, 7
    %463 = vrot.lane.b32.xlu0 %v462, 96
    %v464 = vpop.permute.xlu0 %463
    %v466 = vmul.f32 %v443, %v464
    %468 = vrot.lane.b32.xlu0 %v466, 32
    %v469 = vpop.permute.xlu0 %468
    %v471 = vadd.f32 %v456, %v469
    %v473 = vrot.slane %v471, 2
    %474 = vrot.lane.b32.xlu0 %v473, 64
    %v475 = vpop.permute.xlu0 %474
    %v476 = vsel %vm116, %v475, 0
    %478 = vmatprep.subr.mxu0 0.0
    %479 = vmatpush1.msra.mxu0 0.0
    %480 = vmatprep.subr.mxu0 0.0
    %481 = vmatpush1.msra.mxu0 0.0
    %482 = vmatprep.subr.mxu0 0.0
    %483 = vmatpush1.msra.mxu0 0.0
    %484 = vmatprep.subr.mxu0 0.0
    %485 = vmatpush1.msra.mxu0 0.0
    %486 = vmatprep.subr.mxu0 0.0
    %487 = vmatpush1.msra.mxu0 0.0
    %488 = vmatprep.subr.mxu0 0.0
    %489 = vmatpush1.msra.mxu0 0.0
    %490 = vmatprep.subr.mxu0 0.0
    %491 = vmatpush1.msra.mxu0 0.0
    %492 = vmatprep.subr.mxu0 0.0
    %493 = vmatpush1.msra.mxu0 0.0
    %494 = vmatprep.subr.mxu0 0.0
    %495 = vmatpush1.msra.mxu0 0.0
    %496 = vmatprep.subr.mxu0 0.0
    %497 = vmatpush1.msra.mxu0 0.0
    %498 = vmatprep.subr.mxu0 0.0
    %499 = vmatpush1.msra.mxu0 0.0
    %500 = vmatprep.subr.mxu0 0.0
    %501 = vmatpush1.msra.mxu0 0.0
    %502 = vmatprep.subr.mxu0 0.0
    %503 = vmatpush1.msra.mxu0 %v31
    %504 = vmatprep.subr.mxu0 0.0
    %505 = vmatpush1.msra.mxu0 %v30
    %506 = vmatprep.subr.mxu0 0.0
    %507 = vmatpush1.msra.mxu0 %v29
    %508 = vmatprep.subr.mxu0 0.0
    %509 = vmatpush1.msra.mxu0 %v28
    %510 = vmatprep.subr.mxu0 0.0
    %511 = vmatpush2.msra.mxu0 0.0
    %512 = vmatprep.subr.mxu0 0.0
    %513 = vmatpush2.msra.mxu0 0.0
    %514 = vmatprep.subr.mxu0 0.0
    %515 = vmatpush2.msra.mxu0 0.0
    %516 = vmatprep.subr.mxu0 0.0
    %517 = vmatpush2.msra.mxu0 0.0
    %518 = vmatprep.subr.mxu0 0.0
    %519 = vmatpush2.msra.mxu0 0.0
    %520 = vmatprep.subr.mxu0 0.0
    %521 = vmatpush2.msra.mxu0 0.0
    %522 = vmatprep.subr.mxu0 0.0
    %523 = vmatpush2.msra.mxu0 0.0
    %524 = vmatprep.subr.mxu0 0.0
    %525 = vmatpush2.msra.mxu0 0.0
    %526 = vmatprep.subr.mxu0 0.0
    %527 = vmatpush2.msra.mxu0 0.0
    %528 = vmatprep.subr.mxu0 0.0
    %529 = vmatpush2.msra.mxu0 0.0
    %530 = vmatprep.subr.mxu0 0.0
    %531 = vmatpush2.msra.mxu0 0.0
    %532 = vmatprep.subr.mxu0 0.0
    %533 = vmatpush2.msra.mxu0 0.0
    %534 = vmatprep.subr.mxu0 0.0
    %535 = vmatpush2.msra.mxu0 0.0
    %536 = vmatprep.subr.mxu0 0.0
    %537 = vmatpush2.msra.mxu0 0.0
    %538 = vmatprep.subr.mxu0 0.0
    %539 = vmatpush2.msra.mxu0 0.0
    %540 = vmatprep.subr.mxu0 0.0
    %541 = vmatpush2.msra.mxu0 0.0
    %542 = vmatprep.mubr.f32.mxu0 0.0
    %543 = vmatmul.mubr.f32.gmra.mxu0 %v476
    %v544 = vpop.f32.mrf.mxu0
    %v545 = vadd.f32 0.0, %v544
    %v546 = vpop.f32.mrf.mxu0
    %547 = vdwg.mxu0
    %v549 = vrot.slane %v545, 5
    %v551 = vadd.f32 %v112, %v549
    %v552 = vxor.u32 %v551, 2147483648
    %v553 = vmul.f32 %v552, 1.442695
    %v554 = vpow.pop %v553
    %v555 = vadd.f32 %v554, 1.0
    %v556 = vrcp.pop %v555
    %v557 = vmul.f32 1.0, %v556
    %v558 = vadd.f32 %v545, %v198
    %v560 = vrot.slane %v558, 5
    %561 = vrot.lane.b32.xlu0 %v560, 64
    %v562 = vpop.permute.xlu0 %561
    %v564 = vmul.f32 %v557, %v562
    %566 = vrot.lane.b32.xlu0 %v564, 64
    %v567 = vpop.permute.xlu0 %566
    %v569 = vadd.f32 %v112, %v567
    %v570 = vtanh.pop %v569
    %v572 = vrot.slane %v570, 1
    %v574 = vsub.f32 %v471, %v572
    %v576 = vrot.slane %v574, 7
    %577 = vrot.lane.b32.xlu0 %v576, 96
    %v578 = vpop.permute.xlu0 %577
    %v580 = vmul.f32 %v557, %v578
    %582 = vrot.lane.b32.xlu0 %v580, 32
    %v583 = vpop.permute.xlu0 %582
    %v585 = vadd.f32 %v570, %v583
    %v587 = vrot.slane %v585, 3
    %588 = vrot.lane.b32.xlu0 %v587, 64
    %v589 = vpop.permute.xlu0 %588
    %v590 = vsel %vm116, %v589, 0
    %592 = vmatprep.subr.mxu0 0.0
    %593 = vmatpush1.msra.mxu0 0.0
    %594 = vmatprep.subr.mxu0 0.0
    %595 = vmatpush1.msra.mxu0 0.0
    %596 = vmatprep.subr.mxu0 0.0
    %597 = vmatpush1.msra.mxu0 0.0
    %598 = vmatprep.subr.mxu0 0.0
    %599 = vmatpush1.msra.mxu0 0.0
    %600 = vmatprep.subr.mxu0 0.0
    %601 = vmatpush1.msra.mxu0 0.0
    %602 = vmatprep.subr.mxu0 0.0
    %603 = vmatpush1.msra.mxu0 0.0
    %604 = vmatprep.subr.mxu0 0.0
    %605 = vmatpush1.msra.mxu0 0.0
    %606 = vmatprep.subr.mxu0 0.0
    %607 = vmatpush1.msra.mxu0 0.0
    %608 = vmatprep.subr.mxu0 0.0
    %609 = vmatpush1.msra.mxu0 0.0
    %610 = vmatprep.subr.mxu0 0.0
    %611 = vmatpush1.msra.mxu0 0.0
    %612 = vmatprep.subr.mxu0 0.0
    %613 = vmatpush1.msra.mxu0 0.0
    %614 = vmatprep.subr.mxu0 0.0
    %615 = vmatpush1.msra.mxu0 0.0
    %616 = vmatprep.subr.mxu0 0.0
    %617 = vmatpush1.msra.mxu0 %v31
    %618 = vmatprep.subr.mxu0 0.0
    %619 = vmatpush1.msra.mxu0 %v30
    %620 = vmatprep.subr.mxu0 0.0
    %621 = vmatpush1.msra.mxu0 %v29
    %622 = vmatprep.subr.mxu0 0.0
    %623 = vmatpush1.msra.mxu0 %v28
    %624 = vmatprep.subr.mxu0 0.0
    %625 = vmatpush2.msra.mxu0 0.0
    %626 = vmatprep.subr.mxu0 0.0
    %627 = vmatpush2.msra.mxu0 0.0
    %628 = vmatprep.subr.mxu0 0.0
    %629 = vmatpush2.msra.mxu0 0.0
    %630 = vmatprep.subr.mxu0 0.0
    %631 = vmatpush2.msra.mxu0 0.0
    %632 = vmatprep.subr.mxu0 0.0
    %633 = vmatpush2.msra.mxu0 0.0
    %634 = vmatprep.subr.mxu0 0.0
    %635 = vmatpush2.msra.mxu0 0.0
    %636 = vmatprep.subr.mxu0 0.0
    %637 = vmatpush2.msra.mxu0 0.0
    %638 = vmatprep.subr.mxu0 0.0
    %639 = vmatpush2.msra.mxu0 0.0
    %640 = vmatprep.subr.mxu0 0.0
    %641 = vmatpush2.msra.mxu0 0.0
    %642 = vmatprep.subr.mxu0 0.0
    %643 = vmatpush2.msra.mxu0 0.0
    %644 = vmatprep.subr.mxu0 0.0
    %645 = vmatpush2.msra.mxu0 0.0
    %646 = vmatprep.subr.mxu0 0.0
    %647 = vmatpush2.msra.mxu0 0.0
    %648 = vmatprep.subr.mxu0 0.0
    %649 = vmatpush2.msra.mxu0 0.0
    %650 = vmatprep.subr.mxu0 0.0
    %651 = vmatpush2.msra.mxu0 0.0
    %652 = vmatprep.subr.mxu0 0.0
    %653 = vmatpush2.msra.mxu0 0.0
    %654 = vmatprep.subr.mxu0 0.0
    %655 = vmatpush2.msra.mxu0 0.0
    %656 = vmatprep.mubr.f32.mxu0 0.0
    %657 = vmatmul.mubr.f32.gmra.mxu0 %v590
    %v658 = vpop.f32.mrf.mxu0
    %v659 = vadd.f32 0.0, %v658
    %v660 = vpop.f32.mrf.mxu0
    %661 = vdwg.mxu0
    %v663 = vrot.slane %v659, 4
    %v665 = vadd.f32 %v112, %v663
    %v666 = vxor.u32 %v665, 2147483648
    %v667 = vmul.f32 %v666, 1.442695
    %v668 = vpow.pop %v667
    %v669 = vadd.f32 %v668, 1.0
    %v670 = vrcp.pop %v669
    %v671 = vmul.f32 1.0, %v670
    %v672 = vadd.f32 %v659, %v198
    %v674 = vrot.slane %v672, 4
    %675 = vrot.lane.b32.xlu0 %v674, 64
    %v676 = vpop.permute.xlu0 %675
    %v678 = vmul.f32 %v671, %v676
    %680 = vrot.lane.b32.xlu0 %v678, 64
    %v681 = vpop.permute.xlu0 %680
    %v683 = vadd.f32 %v112, %v681
    %v684 = vtanh.pop %v683
    %v686 = vrot.slane %v684, 1
    %v688 = vsub.f32 %v585, %v686
    %v690 = vrot.slane %v688, 7
    %691 = vrot.lane.b32.xlu0 %v690, 96
    %v692 = vpop.permute.xlu0 %691
    %v694 = vmul.f32 %v671, %v692
    %696 = vrot.lane.b32.xlu0 %v694, 32
    %v697 = vpop.permute.xlu0 %696
    %v699 = vadd.f32 %v684, %v697
    %v701 = vrot.slane %v699, 4
    %702 = vrot.lane.b32.xlu0 %v701, 64
    %v703 = vpop.permute.xlu0 %702
    %v704 = vsel %vm116, %v703, 0
    %706 = vmatprep.subr.mxu0 0.0
    %707 = vmatpush1.msra.mxu0 0.0
    %708 = vmatprep.subr.mxu0 0.0
    %709 = vmatpush1.msra.mxu0 0.0
    %710 = vmatprep.subr.mxu0 0.0
    %711 = vmatpush1.msra.mxu0 0.0
    %712 = vmatprep.subr.mxu0 0.0
    %713 = vmatpush1.msra.mxu0 0.0
    %714 = vmatprep.subr.mxu0 0.0
    %715 = vmatpush1.msra.mxu0 0.0
    %716 = vmatprep.subr.mxu0 0.0
    %717 = vmatpush1.msra.mxu0 0.0
    %718 = vmatprep.subr.mxu0 0.0
    %719 = vmatpush1.msra.mxu0 0.0
    %720 = vmatprep.subr.mxu0 0.0
    %721 = vmatpush1.msra.mxu0 0.0
    %722 = vmatprep.subr.mxu0 0.0
    %723 = vmatpush1.msra.mxu0 0.0
    %724 = vmatprep.subr.mxu0 0.0
    %725 = vmatpush1.msra.mxu0 0.0
    %726 = vmatprep.subr.mxu0 0.0
    %727 = vmatpush1.msra.mxu0 0.0
    %728 = vmatprep.subr.mxu0 0.0
    %729 = vmatpush1.msra.mxu0 0.0
    %730 = vmatprep.subr.mxu0 0.0
    %731 = vmatpush1.msra.mxu0 %v31
    %732 = vmatprep.subr.mxu0 0.0
    %733 = vmatpush1.msra.mxu0 %v30
    %734 = vmatprep.subr.mxu0 0.0
    %735 = vmatpush1.msra.mxu0 %v29
    %736 = vmatprep.subr.mxu0 0.0
    %737 = vmatpush1.msra.mxu0 %v28
    %738 = vmatprep.subr.mxu0 0.0
    %739 = vmatpush2.msra.mxu0 0.0
    %740 = vmatprep.subr.mxu0 0.0
    %741 = vmatpush2.msra.mxu0 0.0
    %742 = vmatprep.subr.mxu0 0.0
    %743 = vmatpush2.msra.mxu0 0.0
    %744 = vmatprep.subr.mxu0 0.0
    %745 = vmatpush2.msra.mxu0 0.0
    %746 = vmatprep.subr.mxu0 0.0
    %747 = vmatpush2.msra.mxu0 0.0
    %748 = vmatprep.subr.mxu0 0.0
    %749 = vmatpush2.msra.mxu0 0.0
    %750 = vmatprep.subr.mxu0 0.0
    %751 = vmatpush2.msra.mxu0 0.0
    %752 = vmatprep.subr.mxu0 0.0
    %753 = vmatpush2.msra.mxu0 0.0
    %754 = vmatprep.subr.mxu0 0.0
    %755 = vmatpush2.msra.mxu0 0.0
    %756 = vmatprep.subr.mxu0 0.0
    %757 = vmatpush2.msra.mxu0 0.0
    %758 = vmatprep.subr.mxu0 0.0
    %759 = vmatpush2.msra.mxu0 0.0
    %760 = vmatprep.subr.mxu0 0.0
    %761 = vmatpush2.msra.mxu0 0.0
    %762 = vmatprep.subr.mxu0 0.0
    %763 = vmatpush2.msra.mxu0 0.0
    %764 = vmatprep.subr.mxu0 0.0
    %765 = vmatpush2.msra.mxu0 0.0
    %766 = vmatprep.subr.mxu0 0.0
    %767 = vmatpush2.msra.mxu0 0.0
    %768 = vmatprep.subr.mxu0 0.0
    %769 = vmatpush2.msra.mxu0 0.0
    %770 = vmatprep.mubr.f32.mxu0 0.0
    %771 = vmatmul.mubr.f32.gmra.mxu0 %v704
    %v772 = vpop.f32.mrf.mxu0
    %v773 = vadd.f32 0.0, %v772
    %v774 = vpop.f32.mrf.mxu0
    %775 = vdwg.mxu0
    %v777 = vrot.slane %v773, 3
    %v779 = vadd.f32 %v112, %v777
    %v780 = vxor.u32 %v779, 2147483648
    %v781 = vmul.f32 %v780, 1.442695
    %v782 = vpow.pop %v781
    %v783 = vadd.f32 %v782, 1.0
    %v784 = vrcp.pop %v783
    %v785 = vmul.f32 1.0, %v784
    %v786 = vadd.f32 %v773, %v198
    %v788 = vrot.slane %v786, 3
    %789 = vrot.lane.b32.xlu0 %v788, 64
    %v790 = vpop.permute.xlu0 %789
    %v792 = vmul.f32 %v785, %v790
    %794 = vrot.lane.b32.xlu0 %v792, 64
    %v795 = vpop.permute.xlu0 %794
    %v797 = vadd.f32 %v112, %v795
    %v798 = vtanh.pop %v797
    %v800 = vrot.slane %v798, 1
    %v802 = vsub.f32 %v699, %v800
    %v804 = vrot.slane %v802, 7
    %805 = vrot.lane.b32.xlu0 %v804, 96
    %v806 = vpop.permute.xlu0 %805
    %v808 = vmul.f32 %v785, %v806
    %810 = vrot.lane.b32.xlu0 %v808, 32
    %v811 = vpop.permute.xlu0 %810
    %v813 = vadd.f32 %v798, %v811
    %v815 = vrot.slane %v813, 5
    %816 = vrot.lane.b32.xlu0 %v815, 64
    %v817 = vpop.permute.xlu0 %816
    %v818 = vsel %vm116, %v817, 0
    %820 = vmatprep.subr.mxu0 0.0
    %821 = vmatpush1.msra.mxu0 0.0
    %822 = vmatprep.subr.mxu0 0.0
    %823 = vmatpush1.msra.mxu0 0.0
    %824 = vmatprep.subr.mxu0 0.0
    %825 = vmatpush1.msra.mxu0 0.0
    %826 = vmatprep.subr.mxu0 0.0
    %827 = vmatpush1.msra.mxu0 0.0
    %828 = vmatprep.subr.mxu0 0.0
    %829 = vmatpush1.msra.mxu0 0.0
    %830 = vmatprep.subr.mxu0 0.0
    %831 = vmatpush1.msra.mxu0 0.0
    %832 = vmatprep.subr.mxu0 0.0
    %833 = vmatpush1.msra.mxu0 0.0
    %834 = vmatprep.subr.mxu0 0.0
    %835 = vmatpush1.msra.mxu0 0.0
    %836 = vmatprep.subr.mxu0 0.0
    %837 = vmatpush1.msra.mxu0 0.0
    %838 = vmatprep.subr.mxu0 0.0
    %839 = vmatpush1.msra.mxu0 0.0
    %840 = vmatprep.subr.mxu0 0.0
    %841 = vmatpush1.msra.mxu0 0.0
    %842 = vmatprep.subr.mxu0 0.0
    %843 = vmatpush1.msra.mxu0 0.0
    %844 = vmatprep.subr.mxu0 0.0
    %845 = vmatpush1.msra.mxu0 %v31
    %846 = vmatprep.subr.mxu0 0.0
    %847 = vmatpush1.msra.mxu0 %v30
    %848 = vmatprep.subr.mxu0 0.0
    %849 = vmatpush1.msra.mxu0 %v29
    %850 = vmatprep.subr.mxu0 0.0
    %851 = vmatpush1.msra.mxu0 %v28
    %852 = vmatprep.subr.mxu0 0.0
    %853 = vmatpush2.msra.mxu0 0.0
    %854 = vmatprep.subr.mxu0 0.0
    %855 = vmatpush2.msra.mxu0 0.0
    %856 = vmatprep.subr.mxu0 0.0
    %857 = vmatpush2.msra.mxu0 0.0
    %858 = vmatprep.subr.mxu0 0.0
    %859 = vmatpush2.msra.mxu0 0.0
    %860 = vmatprep.subr.mxu0 0.0
    %861 = vmatpush2.msra.mxu0 0.0
    %862 = vmatprep.subr.mxu0 0.0
    %863 = vmatpush2.msra.mxu0 0.0
    %864 = vmatprep.subr.mxu0 0.0
    %865 = vmatpush2.msra.mxu0 0.0
    %866 = vmatprep.subr.mxu0 0.0
    %867 = vmatpush2.msra.mxu0 0.0
    %868 = vmatprep.subr.mxu0 0.0
    %869 = vmatpush2.msra.mxu0 0.0
    %870 = vmatprep.subr.mxu0 0.0
    %871 = vmatpush2.msra.mxu0 0.0
    %872 = vmatprep.subr.mxu0 0.0
    %873 = vmatpush2.msra.mxu0 0.0
    %874 = vmatprep.subr.mxu0 0.0
    %875 = vmatpush2.msra.mxu0 0.0
    %876 = vmatprep.subr.mxu0 0.0
    %877 = vmatpush2.msra.mxu0 0.0
    %878 = vmatprep.subr.mxu0 0.0
    %879 = vmatpush2.msra.mxu0 0.0
    %880 = vmatprep.subr.mxu0 0.0
    %881 = vmatpush2.msra.mxu0 0.0
    %882 = vmatprep.subr.mxu0 0.0
    %883 = vmatpush2.msra.mxu0 0.0
    %884 = vmatprep.mubr.f32.mxu0 0.0
    %885 = vmatmul.mubr.f32.gmra.mxu0 %v818
    %v886 = vpop.f32.mrf.mxu0
    %v887 = vadd.f32 0.0, %v886
    %v888 = vpop.f32.mrf.mxu0
    %889 = vdwg.mxu0
    %v891 = vrot.slane %v887, 2
    %v893 = vadd.f32 %v112, %v891
    %v894 = vxor.u32 %v893, 2147483648
    %v895 = vmul.f32 %v894, 1.442695
    %v896 = vpow.pop %v895
    %v897 = vadd.f32 %v896, 1.0
    %v898 = vrcp.pop %v897
    %v899 = vmul.f32 1.0, %v898
    %v900 = vadd.f32 %v887, %v198
    %v902 = vrot.slane %v900, 2
    %903 = vrot.lane.b32.xlu0 %v902, 64
    %v904 = vpop.permute.xlu0 %903
    %v906 = vmul.f32 %v899, %v904
    %908 = vrot.lane.b32.xlu0 %v906, 64
    %v909 = vpop.permute.xlu0 %908
    %v911 = vadd.f32 %v112, %v909
    %v912 = vtanh.pop %v911
    %v914 = vrot.slane %v912, 1
    %v916 = vsub.f32 %v813, %v914
    %v918 = vrot.slane %v916, 7
    %919 = vrot.lane.b32.xlu0 %v918, 96
    %v920 = vpop.permute.xlu0 %919
    %v922 = vmul.f32 %v899, %v920
    %924 = vrot.lane.b32.xlu0 %v922, 32
    %v925 = vpop.permute.xlu0 %924
    %v927 = vadd.f32 %v912, %v925
    %v929 = vrot.slane %v927, 6
    %930 = vrot.lane.b32.xlu0 %v929, 64
    %v931 = vpop.permute.xlu0 %930
    %v932 = vsel %vm116, %v931, 0
    %934 = vmatprep.subr.mxu0 0.0
    %935 = vmatpush1.msra.mxu0 0.0
    %936 = vmatprep.subr.mxu0 0.0
    %937 = vmatpush1.msra.mxu0 0.0
    %938 = vmatprep.subr.mxu0 0.0
    %939 = vmatpush1.msra.mxu0 0.0
    %940 = vmatprep.subr.mxu0 0.0
    %941 = vmatpush1.msra.mxu0 0.0
    %942 = vmatprep.subr.mxu0 0.0
    %943 = vmatpush1.msra.mxu0 0.0
    %944 = vmatprep.subr.mxu0 0.0
    %945 = vmatpush1.msra.mxu0 0.0
    %946 = vmatprep.subr.mxu0 0.0
    %947 = vmatpush1.msra.mxu0 0.0
    %948 = vmatprep.subr.mxu0 0.0
    %949 = vmatpush1.msra.mxu0 0.0
    %950 = vmatprep.subr.mxu0 0.0
    %951 = vmatpush1.msra.mxu0 0.0
    %952 = vmatprep.subr.mxu0 0.0
    %953 = vmatpush1.msra.mxu0 0.0
    %954 = vmatprep.subr.mxu0 0.0
    %955 = vmatpush1.msra.mxu0 0.0
    %956 = vmatprep.subr.mxu0 0.0
    %957 = vmatpush1.msra.mxu0 0.0
    %958 = vmatprep.subr.mxu0 0.0
    %959 = vmatpush1.msra.mxu0 %v31
    %960 = vmatprep.subr.mxu0 0.0
    %961 = vmatpush1.msra.mxu0 %v30
    %962 = vmatprep.subr.mxu0 0.0
    %963 = vmatpush1.msra.mxu0 %v29
    %964 = vmatprep.subr.mxu0 0.0
    %965 = vmatpush1.msra.mxu0 %v28
    %966 = vmatprep.subr.mxu0 0.0
    %967 = vmatpush2.msra.mxu0 0.0
    %968 = vmatprep.subr.mxu0 0.0
    %969 = vmatpush2.msra.mxu0 0.0
    %970 = vmatprep.subr.mxu0 0.0
    %971 = vmatpush2.msra.mxu0 0.0
    %972 = vmatprep.subr.mxu0 0.0
    %973 = vmatpush2.msra.mxu0 0.0
    %974 = vmatprep.subr.mxu0 0.0
    %975 = vmatpush2.msra.mxu0 0.0
    %976 = vmatprep.subr.mxu0 0.0
    %977 = vmatpush2.msra.mxu0 0.0
    %978 = vmatprep.subr.mxu0 0.0
    %979 = vmatpush2.msra.mxu0 0.0
    %980 = vmatprep.subr.mxu0 0.0
    %981 = vmatpush2.msra.mxu0 0.0
    %982 = vmatprep.subr.mxu0 0.0
    %983 = vmatpush2.msra.mxu0 0.0
    %984 = vmatprep.subr.mxu0 0.0
    %985 = vmatpush2.msra.mxu0 0.0
    %986 = vmatprep.subr.mxu0 0.0
    %987 = vmatpush2.msra.mxu0 0.0
    %988 = vmatprep.subr.mxu0 0.0
    %989 = vmatpush2.msra.mxu0 0.0
    %990 = vmatprep.subr.mxu0 0.0
    %991 = vmatpush2.msra.mxu0 0.0
    %992 = vmatprep.subr.mxu0 0.0
    %993 = vmatpush2.msra.mxu0 0.0
    %994 = vmatprep.subr.mxu0 0.0
    %995 = vmatpush2.msra.mxu0 0.0
    %996 = vmatprep.subr.mxu0 0.0
    %997 = vmatpush2.msra.mxu0 0.0
    %998 = vmatprep.mubr.f32.mxu0 0.0
    %999 = vmatmul.mubr.f32.gmra.mxu0 %v932
    %v1000 = vpop.f32.mrf.mxu0
    %v1001 = vadd.f32 0.0, %v1000
    %v1002 = vpop.f32.mrf.mxu0
    %1003 = vdwg.mxu0
    %v1005 = vrot.slane %v1001, 1
    %v1007 = vadd.f32 %v112, %v1005
    %v1008 = vxor.u32 %v1007, 2147483648
    %v1009 = vmul.f32 %v1008, 1.442695
    %v1010 = vpow.pop %v1009
    %v1011 = vadd.f32 %v1010, 1.0
    %v1012 = vrcp.pop %v1011
    %v1013 = vmul.f32 1.0, %v1012
    %v1014 = vadd.f32 %v1001, %v198
    %v1016 = vrot.slane %v1014, 1
    %1017 = vrot.lane.b32.xlu0 %v1016, 64
    %v1018 = vpop.permute.xlu0 %1017
    %v1020 = vmul.f32 %v1013, %v1018
    %1022 = vrot.lane.b32.xlu0 %v1020, 64
    %v1023 = vpop.permute.xlu0 %1022
    %v1025 = vadd.f32 %v112, %v1023
    %v1026 = vtanh.pop %v1025
    %v1028 = vrot.slane %v1026, 1
    %v1030 = vsub.f32 %v927, %v1028
    %v1032 = vrot.slane %v1030, 7
    %1033 = vrot.lane.b32.xlu0 %v1032, 96
    %v1034 = vpop.permute.xlu0 %1033
    %v1036 = vmul.f32 %v1013, %v1034
    %1038 = vrot.lane.b32.xlu0 %v1036, 32
    %v1039 = vpop.permute.xlu0 %1038
    %v1041 = vadd.f32 %v1026, %v1039
    %1043 = vrot.lane.b32.xlu0 %v1041, 64
    %v1044 = vpop.permute.xlu0 %1043
    %vm1046 = vcmask 261127
    %1047 = vst.msk [vmem:[#allocation4 - $0x7] sm:$0x80] %vm1046, %v1044
    %v1048 = vld [vmem:[%s5] sm:$0xff]
    %v1049 = vld [vmem:[%s5 + $0x8] sm:$0xff]
    %v1050 = vld [vmem:[%s5 + $0x10] sm:$0xff]
    %v1051 = vld [vmem:[%s5 + $0x18] sm:$0xff]
    %v1052 = vld [vmem:[%s5 + $0x20] sm:$0x1]
    %1053 = vmatprep.subr.mxu0 0.0
    %1054 = vmatpush1.msra.mxu0 0.0
    %1055 = vmatprep.subr.mxu0 0.0
    %1056 = vmatpush1.msra.mxu0 0.0
    %1057 = vmatprep.subr.mxu0 0.0
    %1058 = vmatpush1.msra.mxu0 0.0
    %1059 = vmatprep.subr.mxu0 0.0
    %1060 = vmatpush1.msra.mxu0 0.0
    %1061 = vmatprep.subr.mxu0 0.0
    %1062 = vmatpush1.msra.mxu0 0.0
    %1063 = vmatprep.subr.mxu0 0.0
    %1064 = vmatpush1.msra.mxu0 0.0
    %1065 = vmatprep.subr.mxu0 0.0
    %1066 = vmatpush1.msra.mxu0 0.0
    %1067 = vmatprep.subr.mxu0 0.0
    %1068 = vmatpush1.msra.mxu0 0.0
    %1069 = vmatprep.subr.mxu0 0.0
    %1070 = vmatpush1.msra.mxu0 0.0
    %1071 = vmatprep.subr.mxu0 0.0
    %1072 = vmatpush1.msra.mxu0 0.0
    %1073 = vmatprep.subr.mxu0 0.0
    %1074 = vmatpush1.msra.mxu0 0.0
    %1075 = vmatprep.subr.mxu0 0.0
    %1076 = vmatpush1.msra.mxu0 0.0
    %1077 = vmatprep.subr.mxu0 0.0
    %1078 = vmatpush1.msra.mxu0 %v1051
    %1079 = vmatprep.subr.mxu0 0.0
    %1080 = vmatpush1.msra.mxu0 %v1050
    %1081 = vmatprep.subr.mxu0 0.0
    %1082 = vmatpush1.msra.mxu0 %v1049
    %1083 = vmatprep.subr.mxu0 0.0
    %1084 = vmatpush1.msra.mxu0 %v1048
    %1085 = vmatprep.subr.mxu0 0.0
    %1086 = vmatpush2.msra.mxu0 0.0
    %1087 = vmatprep.subr.mxu0 0.0
    %1088 = vmatpush2.msra.mxu0 0.0
    %1089 = vmatprep.subr.mxu0 0.0
    %1090 = vmatpush2.msra.mxu0 0.0
    %1091 = vmatprep.subr.mxu0 0.0
    %1092 = vmatpush2.msra.mxu0 0.0
    %1093 = vmatprep.subr.mxu0 0.0
    %1094 = vmatpush2.msra.mxu0 0.0
    %1095 = vmatprep.subr.mxu0 0.0
    %1096 = vmatpush2.msra.mxu0 0.0
    %1097 = vmatprep.subr.mxu0 0.0
    %1098 = vmatpush2.msra.mxu0 0.0
    %1099 = vmatprep.subr.mxu0 0.0
    %1100 = vmatpush2.msra.mxu0 0.0
    %1101 = vmatprep.subr.mxu0 0.0
    %1102 = vmatpush2.msra.mxu0 0.0
    %1103 = vmatprep.subr.mxu0 0.0
    %1104 = vmatpush2.msra.mxu0 0.0
    %1105 = vmatprep.subr.mxu0 0.0
    %1106 = vmatpush2.msra.mxu0 0.0
    %1107 = vmatprep.subr.mxu0 0.0
    %1108 = vmatpush2.msra.mxu0 0.0
    %1109 = vmatprep.subr.mxu0 0.0
    %1110 = vmatpush2.msra.mxu0 0.0
    %1111 = vmatprep.subr.mxu0 0.0
    %1112 = vmatpush2.msra.mxu0 0.0
    %1113 = vmatprep.subr.mxu0 0.0
    %1114 = vmatpush2.msra.mxu0 0.0
    %1115 = vmatprep.subr.mxu0 0.0
    %1116 = vmatpush2.msra.mxu0 0.0
    %1117 = vmatprep.mubr.f32.mxu0 0.0
    %1118 = vmatmul.mubr.f32.gmra.mxu0 %v248
    %v1119 = vpop.f32.mrf.mxu0
    %v1120 = vadd.f32 %v1052, %v1119
    %v1121 = vpop.f32.mrf.mxu0
    %1122 = vdwg.mxu0
    %vm1123 = vcmask 122880
    %v1124 = vsel %vm1123, %v1120, -inf
    %1125 = vmax.xlane.f32.xlu0 %v1124
    %v1126 = vpop.xlane.xlu0 %1125
    %v1127 = vsub.f32 %v1120, %v1126
    %v1128 = vmul.f32 %v1127, 1.442695
    %v1129 = vpow.pop %v1128
    %v1130 = vsel %vm1123, %v1129, 0.0
    %1131 = vadd.xlane.f32.xlu0 %v1130
    %v1132 = vpop.xlane.xlu0 %1131
    %v1133 = vlog2.pop %v1132
    %v1134 = vmul.f32 %v1133, 0.6931472
    %v1135 = vsub.f32 %v1127, %v1134
    %1136 = vst.msk [vmem:[#allocation2] sm:$0x1] %vm1123, %v1135
    // Predicated region
    $region26: #{decoder_forward.1} parent=1 // pred_check
      _
    $region27: #{decoder_forward.1} parent=1 // pred_check_branch
      %1138 = sbr.rel (0) target = $region29
    $region28: #{decoder_forward.1} parent=1 // pred_region
      %s1140 = ssub.s32 16, 16
      %1141 = vsyncadd [#allocation3], %s1140
      %s1143 = sshll.u32 [#allocation2], 4
      %s1144 = int_to_ptr.vmem [resolvable:$true] %s1143
      %1146 = dma.vmem_to_hbm [thread:$0]  %s1144, 16, %s6, [#allocation3]
    $region29: #{decoder_forward.1} parent=1 // pred_fallthru
      _
    // Predicated region
    $region30: #{decoder_forward.1} parent=1 // pred_check
      _
    $region31: #{decoder_forward.1} parent=1 // pred_check_branch
      %1148 = sbr.rel (0) target = $region33
    $region32: #{decoder_forward.1} parent=1 // pred_region
      %s1150 = ssub.s32 16, 16
      %1151 = vsyncadd [#allocation5], %s1150
      %s1153 = sshll.u32 [#allocation4], 4
      %s1154 = int_to_ptr.vmem [resolvable:$true] %s1153
      %1156 = dma.vmem_to_hbm [thread:$0]  %s1154, 16, %s7, [#allocation5]
    $region33: #{decoder_forward.1} parent=1 // pred_fallthru
      _
    // Predicated region
    $region34: #{decoder_forward.1} parent=1 // pred_check
      _
    $region35: #{decoder_forward.1} parent=1 // pred_check_branch
      %1158 = sbr.rel (0) target = $region37
    $region36: #{decoder_forward.1} parent=1 // pred_region
      %1159 = dma.done [#allocation3], 16
    $region37: #{decoder_forward.1} parent=1 // pred_fallthru
      _
    // Predicated region
    $region38: #{decoder_forward.1} parent=1 // pred_check
      _
    $region39: #{decoder_forward.1} parent=1 // pred_check_branch
      %1161 = sbr.rel (0) target = $region41
    $region40: #{decoder_forward.1} parent=1 // pred_region
      %1162 = dma.done [#allocation5], 16
    $region41: #{decoder_forward.1} parent=1 // pred_fallthru
      _
    %1163 = vsyncpa [#allocation3], 1
    %1164 = vsyncpa [#allocation5], 1

</llo_original>
